<compile_context>
chip_gen: v5e
topology: v5e:2x2
jax: 0.10.0
libtpu: 0.0.40
codegen_flags: <defaults>
</compile_context>

<pallas_src>
import functools
import math

import jax
import jax.numpy as jnp
from jax.experimental import pallas as pl
from jax.experimental.pallas import tpu as pltpu

ALPHA = 2.1
OMEGA = 14.0
EPSILON = 1.0
THETA = 0.5

_LANE_CANDIDATES = (4096, 2048, 1024, 512, 256, 128)


def _awing_kernel(p_ref, t_ref, o_ref, *, alpha, omega, epsilon, theta):
    p = p_ref[...].astype(jnp.float32)
    t = t_ref[...].astype(jnp.float32)

    diff = jnp.abs(t - p)
    is_case1 = diff < theta

    inv_eps = 1.0 / epsilon
    base = theta / epsilon          # compile-time constant, > 0 (wrapper asserts)
    log_base = math.log(base)       # folded at trace time
    ex = alpha - t                  # case-2 exponent

    # Single EUP chain for both branches: select the exponent argument first.
    #   case1: P = (diff/eps)^alpha      = exp(alpha * log(diff/eps))
    #          (diff==0 -> log=-inf -> exp(-inf)=0, exact)
    #   case2: P = (theta/eps)^(alpha-t) = exp(ex * log(theta/eps))
    arg = jnp.where(is_case1, alpha * jnp.log(diff * inv_eps), ex * log_base)
    P = jnp.exp(arg)
    L = jnp.log1p(P)

    # case2:  A*diff - C == A*(diff - theta) + omega*log1p(P)
    #   A = (omega/eps) * 1/(1+P) * (alpha-t) * (theta/eps)^(alpha-t-1)
    #     with (theta/eps)^(alpha-t-1) = P / base  (reuses P).
    A = (omega * inv_eps) * pl.reciprocal(1.0 + P, approx=True) * ex * (P * (1.0 / base))
    out = omega * L + jnp.where(is_case1, 0.0, A * (diff - theta))

    o_ref[...] = out.astype(o_ref.dtype)


def _chip_config():
    """Return (max_block_elems, vmem_limit_bytes) based on physical VMEM."""
    vmem = None
    try:
        info = pltpu.get_tpu_info()
        vmem = getattr(info, "vmem_capacity_bytes", None)
    except Exception:
        vmem = None
    if vmem is not None and vmem >= 96 * 1024 * 1024:
        # v5e / v6e: 128 MiB VMEM -> big blocks amortize the ~0.35us/step cost.
        # 2M elems ~= 8 MiB per f32 buffer; 6 double-buffered buffers ~= 48 MiB.
        return 2 * 1024 * 1024, 96 * 1024 * 1024
    # v7x (64 MiB VMEM) or unknown: keep ~12 MiB working set (EUP-bound there,
    # so bigger blocks would not buy throughput anyway).
    return 512 * 1024, 32 * 1024 * 1024


def _choose_rb(rows, rb_cap):
    """Row-block size: exact divisor of rows, multiple of 8, prefer even #blocks."""
    if rows <= rb_cap:
        if rows >= 16 and rows % 16 == 0:
            return rows // 2        # 2 even blocks (v7x megacore), exact divisor
        return rows                 # single block (tiny input; full-dim is legal)
    best = None
    for rb in range(rb_cap, 7, -8):
        if rows % rb == 0:
            if (rows // rb) % 2 == 0:
                return rb           # exact divisor, even block count
            if best is None:
                best = rb           # exact divisor, odd block count
    return best if best is not None else rb_cap


def _choose_layout(n, max_block_elems):
    """Pick (lane_width, rows, row_block) for a flat array of n (n % 128 == 0)."""
    w = None
    for cand in _LANE_CANDIDATES:
        if n % cand == 0 and n // cand >= 8:
            w = cand
            break
    if w is None:
        for cand in _LANE_CANDIDATES:
            if n % cand == 0:
                w = cand
                break
    assert w is not None, "element count must be a multiple of 128"
    rows = n // w
    rb_cap = max(8, (max_block_elems // w) // 8 * 8)
    rb = _choose_rb(rows, rb_cap)
    return w, rows, rb


def awing_loss(preds, targets, *, alpha=ALPHA, omega=OMEGA, epsilon=EPSILON,
               theta=THETA):
    """Elementwise AWing loss.

    Compute is f32 inside the kernel; the output dtype follows the input dtype.
    On HBM-bound v5e, passing bf16 preds/targets halves memory traffic (~2x).
    """
    assert preds.shape == targets.shape
    assert theta > 0 and epsilon > 0, "theta/epsilon must be positive"
    orig_shape = preds.shape
    dtype = preds.dtype
    n = preds.size

    p_flat = preds.reshape(-1)
    t_flat = targets.reshape(-1)

    # Fast path: no padding copies when already lane aligned (typical heatmap
    # shapes).  Otherwise pad once to a multiple of 8*128; padded elems have
    # diff==0 -> case1 -> loss 0 (no NaN), and are sliced off afterwards.
    pad = 0
    if n % 128 != 0:
        n_aligned = pl.cdiv(n, 1024) * 1024
        pad = n_aligned - n
        p_flat = jnp.pad(p_flat, (0, pad))
        t_flat = jnp.pad(t_flat, (0, pad))
    n_aligned = n + pad

    max_block_elems, vmem_limit = _chip_config()
    w, rows, rb = _choose_layout(n_aligned, max_block_elems)
    p2d = p_flat.reshape(rows, w)
    t2d = t_flat.reshape(rows, w)

    kernel = functools.partial(_awing_kernel, alpha=alpha, omega=omega,
                               epsilon=epsilon, theta=theta)

    grid = (pl.cdiv(rows, rb),)
    itemsize = jnp.dtype(dtype).itemsize
    cost = pl.CostEstimate(
        flops=15 * n_aligned,
        transcendentals=4 * n_aligned,
        bytes_accessed=3 * n_aligned * itemsize,
    )

    out2d = pl.pallas_call(
        kernel,
        out_shape=jax.ShapeDtypeStruct((rows, w), dtype),
        grid_spec=pl.GridSpec(
            grid=grid,
            in_specs=[
                pl.BlockSpec((rb, w), lambda i: (i, 0)),
                pl.BlockSpec((rb, w), lambda i: (i, 0)),
            ],
            out_specs=pl.BlockSpec((rb, w), lambda i: (i, 0)),
        ),
        compiler_params=pltpu.CompilerParams(
            dimension_semantics=("parallel",),
            vmem_limit_bytes=vmem_limit,
        ),
        cost_estimate=cost,
    )(p2d, t2d)

    out_flat = out2d.reshape(-1)
    if pad:
        out_flat = out_flat[:n]
    return out_flat.reshape(orig_shape)


def _awing_ref(preds, targets, *, alpha=ALPHA, omega=OMEGA, epsilon=EPSILON,
               theta=THETA):
    # Pure-JAX reference mirroring the PyTorch forward.
    diff = jnp.abs(targets - preds)
    lc1 = omega * jnp.log1p(jnp.power(diff / epsilon, alpha))
    ex = alpha - targets
    base = theta / epsilon
    A = omega * (1.0 / (1.0 + jnp.power(base, ex))) * ex * jnp.power(
        base, ex - 1.0) * (1.0 / epsilon)
    C = theta * A - omega * jnp.log1p(jnp.power(base, ex))
    lc2 = A * diff - C
    return jnp.where(diff < theta, lc1, lc2)


if __name__ == "__main__":
    key = jax.random.PRNGKey(0)
    k1, k2 = jax.random.split(key)
    # Heatmap-like inputs (NCHW), values in [0, 1] so both branches are hit.
    preds = jax.random.uniform(k1, (2, 4, 16, 16), dtype=jnp.float32)
    targets = jax.random.uniform(k2, (2, 4, 16, 16), dtype=jnp.float32)

    out = awing_loss(preds, targets)
    out = jax.block_until_ready(out)

    ref = _awing_ref(preds, targets)
    assert out.shape == preds.shape
    # Tolerance allows for the EUP approx-reciprocal used inside the kernel.
    assert jnp.allclose(out, ref, atol=5e-3, rtol=5e-3)

    print("KERNEL_OK")
</pallas_src>

<mosaic_0001>
module attributes {stable_mosaic.version = 11 : i64} {
  func.func @_awing_kernel(%arg0: i32, %arg1: memref<8x256xf32, #tpu.memory_space<vmem>>, %arg2: memref<8x256xf32, #tpu.memory_space<vmem>>, %arg3: memref<8x256xf32, #tpu.memory_space<vmem>>) attributes {dimension_semantics = [#tpu.dimension_semantics<parallel>], iteration_bounds = array<i64: 1>, scalar_prefetch = 0 : i64, scratch_operands = 0 : i64, tpu.core_type = #tpu.core_type<tc>, window_params = [{transform_indices = @transform_0, window_bounds = array<i64: 8, 256>}, {transform_indices = @transform_1, window_bounds = array<i64: 8, 256>}, {transform_indices = @transform_2, window_bounds = array<i64: 8, 256>}]} {
    %c0 = arith.constant 0 : index
    %c0_0 = arith.constant 0 : index
    %0 = vector.load %arg1[%c0, %c0_0] : memref<8x256xf32, #tpu.memory_space<vmem>>, vector<8x256xf32>
    %c0_1 = arith.constant 0 : index
    %c0_2 = arith.constant 0 : index
    %1 = vector.load %arg2[%c0_1, %c0_2] : memref<8x256xf32, #tpu.memory_space<vmem>>, vector<8x256xf32>
    %2 = arith.subf %1, %0 : vector<8x256xf32>
    %3 = math.absf %2 : vector<8x256xf32>
    %cst = arith.constant 5.000000e-01 : f32
    %4 = vector.broadcast %cst : f32 to vector<8x256xf32>
    %5 = arith.cmpf olt, %3, %4 : vector<8x256xf32>
    %cst_3 = arith.constant 2.100000e+00 : f32
    %6 = vector.broadcast %cst_3 : f32 to vector<8x256xf32>
    %7 = arith.subf %6, %1 : vector<8x256xf32>
    %cst_4 = arith.constant 1.000000e+00 : f32
    %8 = vector.broadcast %cst_4 : f32 to vector<8x256xf32>
    %9 = arith.mulf %3, %8 : vector<8x256xf32>
    %10 = math.log %9 : vector<8x256xf32>
    %cst_5 = arith.constant 2.100000e+00 : f32
    %11 = vector.broadcast %cst_5 : f32 to vector<8x256xf32>
    %12 = arith.mulf %11, %10 : vector<8x256xf32>
    %cst_6 = arith.constant -0.693147182 : f32
    %13 = vector.broadcast %cst_6 : f32 to vector<8x256xf32>
    %14 = arith.mulf %7, %13 : vector<8x256xf32>
    %15 = arith.select %5, %12, %14 : vector<8x256xi1>, vector<8x256xf32>
    %16 = math.exp %15 : vector<8x256xf32>
    %17 = math.log1p %16 : vector<8x256xf32>
    %cst_7 = arith.constant 1.000000e+00 : f32
    %18 = vector.broadcast %cst_7 : f32 to vector<8x256xf32>
    %19 = arith.addf %18, %16 : vector<8x256xf32>
    %20 = tpu.reciprocal %19 {approx = true} : vector<8x256xf32> -> vector<8x256xf32>
    %cst_8 = arith.constant 1.400000e+01 : f32
    %21 = vector.broadcast %cst_8 : f32 to vector<8x256xf32>
    %22 = arith.mulf %21, %20 : vector<8x256xf32>
    %23 = arith.mulf %22, %7 : vector<8x256xf32>
    %cst_9 = arith.constant 2.000000e+00 : f32
    %24 = vector.broadcast %cst_9 : f32 to vector<8x256xf32>
    %25 = arith.mulf %16, %24 : vector<8x256xf32>
    %26 = arith.mulf %23, %25 : vector<8x256xf32>
    %cst_10 = arith.constant 1.400000e+01 : f32
    %27 = vector.broadcast %cst_10 : f32 to vector<8x256xf32>
    %28 = arith.mulf %27, %17 : vector<8x256xf32>
    %cst_11 = arith.constant 5.000000e-01 : f32
    %29 = vector.broadcast %cst_11 : f32 to vector<8x256xf32>
    %30 = arith.subf %3, %29 : vector<8x256xf32>
    %31 = arith.mulf %26, %30 : vector<8x256xf32>
    %cst_12 = arith.constant 0.000000e+00 : f32
    %32 = vector.broadcast %cst_12 : f32 to vector<8x256xf32>
    %33 = arith.select %5, %32, %31 : vector<8x256xi1>, vector<8x256xf32>
    %34 = arith.addf %28, %33 : vector<8x256xf32>
    %c0_13 = arith.constant 0 : index
    %c0_14 = arith.constant 0 : index
    %35 = vector.load %arg3[%c0_13, %c0_14] : memref<8x256xf32, #tpu.memory_space<vmem>>, vector<8x256xf32>
    tpu.vector_store %arg3[%c0_13, %c0_14], %34 {strides = array<i32>} : memref<8x256xf32, #tpu.memory_space<vmem>>, vector<8x256xf32>,
    return
  }
  func.func @transform_0(%arg0: i32) -> (i32, i32) {
    %c0_i32 = arith.constant 0 : i32
    %c0_i32_0 = arith.constant 0 : i32
    return %arg0, %c0_i32 : i32, i32
  }
  func.func @transform_1(%arg0: i32) -> (i32, i32) {
    %c0_i32 = arith.constant 0 : i32
    %c0_i32_0 = arith.constant 0 : i32
    return %arg0, %c0_i32 : i32, i32
  }
  func.func @transform_2(%arg0: i32) -> (i32, i32) {
    %c0_i32 = arith.constant 0 : i32
    %c0_i32_0 = arith.constant 0 : i32
    return %arg0, %c0_i32 : i32, i32
  }
}

</mosaic_0001>

<llo_original>
// kernel: tpu_custom_call.1
$region0: #{tpu_custom_call.1}
  #allocation0 [shape = 'u32[]', space=smem, size = 0x4, offset = 0x4, fixed_abs, tag = 'smem constant byte address 0x4 - core index']
  #allocation1 [shape = 'u32[72,128]{1,0:T(1,128)}', space=vmem, size = 0x9000, scoped, tag = 'internal scratch']
  %s0 = inlined_call_operand.hbm [shape: f32[8,256], index: 0, kind: input, shape index: {}]
  %s1 = inlined_call_operand.hbm [shape: f32[8,256], index: 1, kind: input, shape index: {}]
  %s2 = inlined_call_operand.hbm [shape: f32[8,256], index: 2, kind: output, shape index: {}]
  %s3 = sld [smem:[#allocation0]]
  $region26: #{tpu_custom_call.1} parent=0
    _
  %s5 = ssub.s32 1, %s3
  %s6 = scalar_select 0, %s5, %s3
  $region1: #{tpu_custom_call.1} parent=0
    #allocation2 [shape = 'u8[8192]{0}', space=vmem, size = 0x2000, scoped, tag = 'input window, operand 0, single buffered']
    #allocation3 [shape = 's32[1]{0}', space=sflag, size = 0x4, scoped, tag = 'scoped memory for tpu_custom_call.1']
    #allocation4 [shape = 's32[1]{0}', space=sflag, size = 0x4, scoped, tag = 'scoped memory for tpu_custom_call.1']
    #allocation5 [shape = 'u8[8192]{0}', space=vmem, size = 0x2000, scoped, tag = 'input window, operand 1, single buffered']
    #allocation6 [shape = 's32[1]{0}', space=sflag, size = 0x4, scoped, tag = 'scoped memory for tpu_custom_call.1']
    #allocation7 [shape = 'u8[8192]{0}', space=vmem, size = 0x2000, scoped, tag = 'output window, operand 0, single buffered']
    %7 = vsyncpa [#allocation3], 0
    %8 = vsyncpa [#allocation6], 0
    %9 = vsyncpa [#allocation4], 0
    // Predicated region
    $region2: #{tpu_custom_call.1} parent=1 // pred_check
      _
    $region3: #{tpu_custom_call.1} parent=1 // pred_check_branch
      %11 = sbr.rel (0) target = $region5
    $region4: #{tpu_custom_call.1} parent=1 // pred_region
      %13 = vsyncadd [#allocation3], 0
      %s15 = sshll.u32 %s0, 4
      %s16 = int_to_ptr.hbm [resolvable:$true] %s15
      %s17 = sshll.u32 [#allocation2], 4
      %s18 = int_to_ptr.vmem [resolvable:$true] %s17
      %20 = dma.hbm_to_vmem [thread:$0]  %s16, 256, %s18, [#allocation3]
    $region5: #{tpu_custom_call.1} parent=1 // pred_fallthru
      _
    // Predicated region
    $region6: #{tpu_custom_call.1} parent=1 // pred_check
      _
    $region7: #{tpu_custom_call.1} parent=1 // pred_check_branch
      %22 = sbr.rel (0) target = $region9
    $region8: #{tpu_custom_call.1} parent=1 // pred_region
      %24 = vsyncadd [#allocation6], 0
      %s26 = sshll.u32 %s1, 4
      %s27 = int_to_ptr.hbm [resolvable:$true] %s26
      %s28 = sshll.u32 [#allocation5], 4
      %s29 = int_to_ptr.vmem [resolvable:$true] %s28
      %31 = dma.hbm_to_vmem [thread:$0]  %s27, 256, %s29, [#allocation6]
    $region9: #{tpu_custom_call.1} parent=1 // pred_fallthru
      _
    // Predicated region
    $region10: #{tpu_custom_call.1} parent=1 // pred_check
      _
    $region11: #{tpu_custom_call.1} parent=1 // pred_check_branch
      %33 = sbr.rel (0) target = $region13
    $region12: #{tpu_custom_call.1} parent=1 // pred_region
      %35 = dma.done [#allocation3], 256
    $region13: #{tpu_custom_call.1} parent=1 // pred_fallthru
      _
    // Predicated region
    $region14: #{tpu_custom_call.1} parent=1 // pred_check
      _
    $region15: #{tpu_custom_call.1} parent=1 // pred_check_branch
      %37 = sbr.rel (0) target = $region17
    $region16: #{tpu_custom_call.1} parent=1 // pred_region
      %39 = dma.done [#allocation6], 256
    $region17: #{tpu_custom_call.1} parent=1 // pred_fallthru
      _
    %v40 = vld [vmem:[#allocation2] sm:$0xff]
    %v41 = vld [vmem:[#allocation2 + $0x8] sm:$0xff]
    %v42 = vld [vmem:[#allocation5] sm:$0xff]
    %v43 = vld [vmem:[#allocation5 + $0x8] sm:$0xff]
    %v44 = vsub.f32 %v42, %v40
    %v45 = vsub.f32 %v43, %v41
    %v46 = vand.u32 2147483647, %v44
    %v47 = vand.u32 2147483647, %v45
    %vm48 = vcmp.lt.f32.partialorder %v46, 0.5
    %vm49 = vcmp.lt.f32.partialorder %v47, 0.5
    %v50 = vsub.f32 2.1, %v42
    %v51 = vsub.f32 2.1, %v43
    %v52 = vlog2.pop %v46
    %v53 = vmul.f32 %v52, 0.6931472
    %v54 = vlog2.pop %v47
    %v55 = vmul.f32 %v54, 0.6931472
    %v56 = vmul.f32 %v53, 2.1
    %v57 = vmul.f32 %v55, 2.1
    %v58 = vmul.f32 %v50, -0.6931472
    %v59 = vmul.f32 %v51, -0.6931472
    %v60 = vsel %vm48, %v56, %v58
    %v61 = vsel %vm49, %v57, %v59
    %v62 = vmul.f32 %v60, 1.442695
    %v63 = vpow.pop %v62
    %v64 = vmul.f32 %v61, 1.442695
    %v65 = vpow.pop %v64
    %v66 = vadd.f32 %v63, 1.0
    %v67 = vlog2.pop %v66
    %v68 = vmul.f32 %v67, 0.6931472
    %v69 = vmul.f32 -0.5, %v63
    %v70 = vadd.f32 %v69, 1.0
    %v71 = vmul.f32 %v70, %v63
    %v72 = vand.u32 2147483647, %v63
    %vm73 = vcmp.lt.f32.partialorder %v72, 0.0004427343
    %v74 = vsel %vm73, %v71, %v68
    %v75 = vadd.f32 %v65, 1.0
    %v76 = vlog2.pop %v75
    %v77 = vmul.f32 %v76, 0.6931472
    %v78 = vmul.f32 -0.5, %v65
    %v79 = vadd.f32 %v78, 1.0
    %v80 = vmul.f32 %v79, %v65
    %v81 = vand.u32 2147483647, %v65
    %vm82 = vcmp.lt.f32.partialorder %v81, 0.0004427343
    %v83 = vsel %vm82, %v80, %v77
    %v84 = vadd.f32 %v63, 1.0
    %v85 = vadd.f32 %v65, 1.0
    %v86 = vrcp.pop %v84
    %v87 = vrcp.pop %v85
    %v88 = vmul.f32 %v86, 14.0
    %v89 = vmul.f32 %v87, 14.0
    %v90 = vmul.f32 %v88, %v50
    %v91 = vmul.f32 %v89, %v51
    %v92 = vmul.f32 %v63, 2.0
    %v93 = vmul.f32 %v65, 2.0
    %v94 = vmul.f32 %v90, %v92
    %v95 = vmul.f32 %v91, %v93
    %v96 = vmul.f32 %v74, 14.0
    %v97 = vmul.f32 %v83, 14.0
    %v98 = vsub.f32 %v46, 0.5
    %v99 = vsub.f32 %v47, 0.5
    %v100 = vmul.f32 %v94, %v98
    %v101 = vmul.f32 %v95, %v99
    %v102 = vsel %vm48, 0.0, %v100
    %v103 = vsel %vm49, 0.0, %v101
    %v104 = vadd.f32 %v96, %v102
    %v105 = vadd.f32 %v97, %v103
    %106 = vst [vmem:[#allocation7] sm:$0xff] %v104
    %107 = vst [vmem:[#allocation7 + $0x8] sm:$0xff] %v105
    // Predicated region
    $region18: #{tpu_custom_call.1} parent=1 // pred_check
      _
    $region19: #{tpu_custom_call.1} parent=1 // pred_check_branch
      %109 = sbr.rel (0) target = $region21
    $region20: #{tpu_custom_call.1} parent=1 // pred_region
      %111 = vsyncadd [#allocation4], 0
      %s113 = sshll.u32 [#allocation7], 4
      %s114 = int_to_ptr.vmem [resolvable:$true] %s113
      %s115 = sshll.u32 %s2, 4
      %s116 = int_to_ptr.hbm [resolvable:$true] %s115
      %118 = dma.vmem_to_hbm [thread:$0]  %s114, 256, %s116, [#allocation4]
    $region21: #{tpu_custom_call.1} parent=1 // pred_fallthru
      _
    // Predicated region
    $region22: #{tpu_custom_call.1} parent=1 // pred_check
      _
    $region23: #{tpu_custom_call.1} parent=1 // pred_check_branch
      %120 = sbr.rel (0) target = $region25
    $region24: #{tpu_custom_call.1} parent=1 // pred_region
      %122 = dma.done [#allocation4], 256
    $region25: #{tpu_custom_call.1} parent=1 // pred_fallthru
      _
    %123 = vsyncpa [#allocation3], 1
    %124 = vsyncpa [#allocation6], 1
    %125 = vsyncpa [#allocation4], 1

</llo_original>
